<compile_context>
chip_gen: v5e
topology: v5e:2x2
jax: 0.10.0
libtpu: 0.0.40
codegen_flags: <defaults>
</compile_context>

<pallas_src>
import functools

import jax
import jax.numpy as jnp
from jax import lax
from jax.experimental import pallas as pl
from jax.experimental.pallas import tpu as pltpu


def _resblock2d_kernel(a_ref, x_ref, wbig_ref, wrs_ref, brs_ref,
                       res_ref, skip_ref, *, C):
    # a_ref   : (C*K*K + Cc + 1, TL)   im2col taps + conditioning + ones row
    # x_ref   : (C, TL)                original input slab (residual path)
    # wbig_ref: (2C, C*K*K + Cc + 1)   fused conv + conditioning weights + bias
    # wrs_ref : (2C, C)                1x1 res/skip weights
    # brs_ref : (2C, 1)                res/skip bias
    # res_ref, skip_ref : (C, TL)

    # Fused dilated conv + 1x1 conditioning conv + both biases: one MXU push.
    a = jnp.dot(wbig_ref[...], a_ref[...],
                preferred_element_type=jnp.float32)          # (2C, TL)

    # fused_add_tanh_sigmoid_multiply
    out = jnp.tanh(a[:C]) * jax.nn.sigmoid(a[C:])            # (C, TL)

    # 1x1 res/skip conv + fused_res_skip
    rs = jnp.dot(wrs_ref[...], out,
                 preferred_element_type=jnp.float32) + brs_ref[...]
    res_ref[...] = (x_ref[...].astype(jnp.float32) + rs[:C]).astype(res_ref.dtype)
    skip_ref[...] = rs[C:].astype(skip_ref.dtype)


def _pick_lane_tile(nhw, cap=2048):
    """Largest multiple-of-128 divisor of nhw not exceeding cap (else full)."""
    if nhw <= cap:
        return nhw
    t = cap - (cap % 128)
    while t >= 128:
        if nhw % t == 0:
            return t
        t -= 128
    return nhw


def resblock2d_forward(x, c, params, *, kernel_size=3,
                       dilation_h=1, dilation_w=1, causal=True):
    """x: (N, C, H, W) f32, c: (N, Cc, H, W) f32 -> (res, skip), both (N, C, H, W)."""
    wfg, bfg, wc, bc, wrs, brs = params
    N, C, H, W = x.shape
    Cc = c.shape[1]
    K = kernel_size
    dh, dw = dilation_h, dilation_w
    HW = H * W
    NHW = N * HW
    two_c = 2 * C

    # --- causal / symmetric padding (top-only pad == pad both + crop bottom) ---
    if causal:
        pad_top, pad_bot = dh * (K - 1), 0
    else:
        ph = dh * (K - 1) // 2
        pad_top, pad_bot = ph, ph
    pw = dw * (K - 1) // 2
    xpad = jnp.pad(x, ((0, 0), (0, 0), (pad_top, pad_bot), (pw, pw)))

    # --- wrapper-side im2col: (N, C*K*K, H*W), tap order (c_in, ky, kx) ---
    taps = []
    for ky in range(K):
        for kx in range(K):
            taps.append(xpad[:, :, ky * dh: ky * dh + H, kx * dw: kx * dw + W])
    x_taps = jnp.stack(taps, axis=2)                       # (N, C, K*K, H, W)
    x_taps = x_taps.reshape(N, C * K * K, HW)

    # --- fold batch onto the lane axis: rows x (N*H*W) slabs ---
    x_taps = x_taps.transpose(1, 0, 2).reshape(C * K * K, NHW)
    c_flat = c.reshape(N, Cc, HW).transpose(1, 0, 2).reshape(Cc, NHW)
    ones_row = jnp.ones((1, NHW), dtype=x.dtype)
    a_mat = jnp.concatenate([x_taps, c_flat, ones_row], axis=0)   # (CKK+Cc+1, NHW)
    x_flat = x.reshape(N, C, HW).transpose(1, 0, 2).reshape(C, NHW)

    # --- fused weight: [wfg_flat | wc | (bfg + bc)] ---
    wbig = jnp.concatenate(
        [wfg.reshape(two_c, C * K * K), wc, (bfg + bc)], axis=1)  # (2C, CKK+Cc+1)

    rows = a_mat.shape[0]
    tl = _pick_lane_tile(NHW)
    grid = (NHW // tl,)

    kernel = functools.partial(_resblock2d_kernel, C=C)

    in_specs = [
        pl.BlockSpec((rows, tl), lambda i: (0, i)),     # a_mat  (taps + cond + 1)
        pl.BlockSpec((C, tl), lambda i: (0, i)),        # x_flat (residual path)
        pl.BlockSpec((two_c, rows), lambda i: (0, 0)),  # wbig   (resident)
        pl.BlockSpec((two_c, C), lambda i: (0, 0)),     # wrs    (resident)
        pl.BlockSpec((two_c, 1), lambda i: (0, 0)),     # brs    (resident)
    ]
    out_specs = (
        pl.BlockSpec((C, tl), lambda i: (0, i)),
        pl.BlockSpec((C, tl), lambda i: (0, i)),
    )
    out_shape = (jax.ShapeDtypeStruct((C, NHW), x.dtype),
                 jax.ShapeDtypeStruct((C, NHW), x.dtype))

    res_flat, skip_flat = pl.pallas_call(
        kernel,
        grid=grid,
        in_specs=in_specs,
        out_specs=out_specs,
        out_shape=out_shape,
        compiler_params=pltpu.CompilerParams(
            dimension_semantics=("parallel",)),
    )(a_mat, x_flat, wbig, wrs, brs)

    # --- back to NCHW ---
    res = res_flat.reshape(C, N, H, W).transpose(1, 0, 2, 3)
    skip = skip_flat.reshape(C, N, H, W).transpose(1, 0, 2, 3)
    return res, skip


def _reference(x, c, params, *, K, dh, dw, causal):
    """Pure-JAX reference mirroring the PyTorch module semantics."""
    wfg, bfg, wc, bc, wrs, brs = params
    C = x.shape[1]
    ph = dh * (K - 1) if causal else dh * (K - 1) // 2
    pw = dw * (K - 1) // 2
    h = lax.conv_general_dilated(
        x, wfg, window_strides=(1, 1), padding=((ph, ph), (pw, pw)),
        rhs_dilation=(dh, dw), dimension_numbers=("NCHW", "OIHW", "NCHW"))
    if causal and ph != 0:
        h = h[:, :, :-ph, :]
    h = h + bfg.reshape(1, -1, 1, 1)
    cf = jnp.einsum("oc,nchw->nohw", wc, c) + bc.reshape(1, -1, 1, 1)
    a = h + cf
    out = jnp.tanh(a[:, :C]) * jax.nn.sigmoid(a[:, C:])
    rs = jnp.einsum("oc,nchw->nohw", wrs, out) + brs.reshape(1, -1, 1, 1)
    return x + rs[:, :C], rs[:, C:]


if __name__ == "__main__":
    # Module config: in_channels == out_channels == skip_channels = 4
    N, C, Cc, H, W = 2, 4, 6, 16, 16
    K, dh, dw, causal = 3, 2, 1, True

    key = jax.random.PRNGKey(0)
    ks = jax.random.split(key, 8)
    x = jax.random.normal(ks[0], (N, C, H, W), jnp.float32)
    c = jax.random.normal(ks[1], (N, Cc, H, W), jnp.float32)
    # Deterministic synthetic parameters (weight_norm folded into effective weights).
    wfg = jax.random.normal(ks[2], (2 * C, C, K, K), jnp.float32) * 0.3
    bfg = jax.random.normal(ks[3], (2 * C, 1), jnp.float32) * 0.1
    wc = jax.random.normal(ks[4], (2 * C, Cc), jnp.float32) * 0.3
    bc = jax.random.normal(ks[5], (2 * C, 1), jnp.float32) * 0.1
    wrs = jax.random.normal(ks[6], (2 * C, C), jnp.float32) * 0.3
    brs = jax.random.normal(ks[7], (2 * C, 1), jnp.float32) * 0.1
    params = (wfg, bfg, wc, bc, wrs, brs)

    res, skip = resblock2d_forward(
        x, c, params, kernel_size=K, dilation_h=dh, dilation_w=dw, causal=causal)
    jax.block_until_ready((res, skip))

    res_ref, skip_ref = _reference(x, c, params, K=K, dh=dh, dw=dw, causal=causal)
    assert res.shape == (N, C, H, W) and skip.shape == (N, C, H, W)
    assert jnp.allclose(res, res_ref, atol=1e-4, rtol=1e-4), \
        float(jnp.max(jnp.abs(res - res_ref)))
    assert jnp.allclose(skip, skip_ref, atol=1e-4, rtol=1e-4), \
        float(jnp.max(jnp.abs(skip - skip_ref)))

    print("KERNEL_OK")
</pallas_src>

<mosaic_0001>
module attributes {stable_mosaic.version = 11 : i64} {
  func.func @_resblock2d_kernel(%arg0: i32, %arg1: memref<43x512xf32, #tpu.memory_space<vmem>>, %arg2: memref<4x512xf32, #tpu.memory_space<vmem>>, %arg3: memref<8x43xf32, #tpu.memory_space<vmem>>, %arg4: memref<8x4xf32, #tpu.memory_space<vmem>>, %arg5: memref<8x1xf32, #tpu.memory_space<vmem>>, %arg6: memref<4x512xf32, #tpu.memory_space<vmem>>, %arg7: memref<4x512xf32, #tpu.memory_space<vmem>>) attributes {dimension_semantics = [#tpu.dimension_semantics<parallel>], iteration_bounds = array<i64: 1>, scalar_prefetch = 0 : i64, scratch_operands = 0 : i64, tpu.core_type = #tpu.core_type<tc>, window_params = [{transform_indices = @transform_0, window_bounds = array<i64: 43, 512>}, {transform_indices = @transform_1, window_bounds = array<i64: 4, 512>}, {pipeline_mode = #tpu.pipeline_mode<synchronous>, transform_indices = @transform_2, window_bounds = array<i64: 8, 43>}, {pipeline_mode = #tpu.pipeline_mode<synchronous>, transform_indices = @transform_3, window_bounds = array<i64: 8, 4>}, {pipeline_mode = #tpu.pipeline_mode<synchronous>, transform_indices = @transform_4, window_bounds = array<i64: 8, 1>}, {transform_indices = @transform_5, window_bounds = array<i64: 4, 512>}, {transform_indices = @transform_6, window_bounds = array<i64: 4, 512>}]} {
    %c0 = arith.constant 0 : index
    %c0_0 = arith.constant 0 : index
    %0 = vector.load %arg3[%c0, %c0_0] : memref<8x43xf32, #tpu.memory_space<vmem>>, vector<8x43xf32>
    %c0_1 = arith.constant 0 : index
    %c0_2 = arith.constant 0 : index
    %1 = vector.load %arg1[%c0_1, %c0_2] : memref<43x512xf32, #tpu.memory_space<vmem>>, vector<43x512xf32>
    %cst = arith.constant dense<0.000000e+00> : vector<8x512xf32>
    %2 = tpu.matmul %0, %1, %cst {dimension_numbers = #tpu.dot_dimension_numbers<[1], [0], [0], [1], [0, 0, 1, 1], [], []>} : vector<8x43xf32>, vector<43x512xf32>, vector<8x512xf32> -> vector<8x512xf32>
    %3 = vector.extract_strided_slice %2 {offsets = [0, 0], sizes = [4, 512], strides = [1, 1]} : vector<8x512xf32> to vector<4x512xf32>
    %4 = math.tanh %3 : vector<4x512xf32>
    %5 = vector.extract_strided_slice %2 {offsets = [4, 0], sizes = [4, 512], strides = [1, 1]} : vector<8x512xf32> to vector<4x512xf32>
    %6 = arith.negf %5 : vector<4x512xf32>
    %7 = math.exp %6 : vector<4x512xf32>
    %cst_3 = arith.constant 1.000000e+00 : f32
    %8 = vector.broadcast %cst_3 : f32 to vector<4x512xf32>
    %9 = arith.addf %8, %7 : vector<4x512xf32>
    %10 = arith.divf %8, %9 : vector<4x512xf32>
    %11 = arith.mulf %4, %10 : vector<4x512xf32>
    %c0_4 = arith.constant 0 : index
    %c0_5 = arith.constant 0 : index
    %12 = vector.load %arg4[%c0_4, %c0_5] : memref<8x4xf32, #tpu.memory_space<vmem>>, vector<8x4xf32>
    %cst_6 = arith.constant dense<0.000000e+00> : vector<8x512xf32>
    %13 = tpu.matmul %12, %11, %cst_6 {dimension_numbers = #tpu.dot_dimension_numbers<[1], [0], [0], [1], [0, 0, 1, 1], [], []>} : vector<8x4xf32>, vector<4x512xf32>, vector<8x512xf32> -> vector<8x512xf32>
    %c0_7 = arith.constant 0 : index
    %c0_8 = arith.constant 0 : index
    %14 = vector.load %arg5[%c0_7, %c0_8] : memref<8x1xf32, #tpu.memory_space<vmem>>, vector<8x1xf32>
    %15 = vector.broadcast %14 : vector<8x1xf32> to vector<8x512xf32>
    %16 = arith.addf %13, %15 : vector<8x512xf32>
    %c0_9 = arith.constant 0 : index
    %c0_10 = arith.constant 0 : index
    %17 = vector.load %arg2[%c0_9, %c0_10] : memref<4x512xf32, #tpu.memory_space<vmem>>, vector<4x512xf32>
    %18 = vector.extract_strided_slice %16 {offsets = [0, 0], sizes = [4, 512], strides = [1, 1]} : vector<8x512xf32> to vector<4x512xf32>
    %19 = arith.addf %17, %18 : vector<4x512xf32>
    %c0_11 = arith.constant 0 : index
    %c0_12 = arith.constant 0 : index
    %20 = vector.load %arg6[%c0_11, %c0_12] : memref<4x512xf32, #tpu.memory_space<vmem>>, vector<4x512xf32>
    tpu.vector_store %arg6[%c0_11, %c0_12], %19 {strides = array<i32>} : memref<4x512xf32, #tpu.memory_space<vmem>>, vector<4x512xf32>,
    %21 = vector.extract_strided_slice %16 {offsets = [4, 0], sizes = [4, 512], strides = [1, 1]} : vector<8x512xf32> to vector<4x512xf32>
    %c0_13 = arith.constant 0 : index
    %c0_14 = arith.constant 0 : index
    %22 = vector.load %arg7[%c0_13, %c0_14] : memref<4x512xf32, #tpu.memory_space<vmem>>, vector<4x512xf32>
    tpu.vector_store %arg7[%c0_13, %c0_14], %21 {strides = array<i32>} : memref<4x512xf32, #tpu.memory_space<vmem>>, vector<4x512xf32>,
    return
  }
  func.func @transform_0(%arg0: i32) -> (i32, i32) {
    %c0_i32 = arith.constant 0 : i32
    %c0_i32_0 = arith.constant 0 : i32
    return %c0_i32, %arg0 : i32, i32
  }
  func.func @transform_1(%arg0: i32) -> (i32, i32) {
    %c0_i32 = arith.constant 0 : i32
    %c0_i32_0 = arith.constant 0 : i32
    return %c0_i32, %arg0 : i32, i32
  }
  func.func @transform_2(%arg0: i32) -> (i32, i32) {
    %c0_i32 = arith.constant 0 : i32
    %c0_i32_0 = arith.constant 0 : i32
    %c0_i32_1 = arith.constant 0 : i32
    return %c0_i32, %c0_i32_0 : i32, i32
  }
  func.func @transform_3(%arg0: i32) -> (i32, i32) {
    %c0_i32 = arith.constant 0 : i32
    %c0_i32_0 = arith.constant 0 : i32
    %c0_i32_1 = arith.constant 0 : i32
    return %c0_i32, %c0_i32_0 : i32, i32
  }
  func.func @transform_4(%arg0: i32) -> (i32, i32) {
    %c0_i32 = arith.constant 0 : i32
    %c0_i32_0 = arith.constant 0 : i32
    %c0_i32_1 = arith.constant 0 : i32
    return %c0_i32, %c0_i32_0 : i32, i32
  }
  func.func @transform_5(%arg0: i32) -> (i32, i32) {
    %c0_i32 = arith.constant 0 : i32
    %c0_i32_0 = arith.constant 0 : i32
    return %c0_i32, %arg0 : i32, i32
  }
  func.func @transform_6(%arg0: i32) -> (i32, i32) {
    %c0_i32 = arith.constant 0 : i32
    %c0_i32_0 = arith.constant 0 : i32
    return %c0_i32, %arg0 : i32, i32
  }
}

</mosaic_0001>

<llo_original>
// kernel: tpu_custom_call.1
$region0: #{tpu_custom_call.1}
  #allocation0 [shape = 'u32[]', space=smem, size = 0x4, offset = 0x4, fixed_abs, tag = 'smem constant byte address 0x4 - core index']
  #allocation1 [shape = 'u32[72,128]{1,0:T(1,128)}', space=vmem, size = 0x9000, scoped, tag = 'internal scratch']
  %s0 = inlined_call_operand.hbm [shape: f32[43,512], index: 0, kind: input, shape index: {}]
  %s1 = inlined_call_operand.vmem [shape: f32[4,512], index: 1, kind: input, shape index: {}]
  %s2 = inlined_call_operand.hbm [shape: f32[8,43], index: 2, kind: input, shape index: {}]
  %s3 = inlined_call_operand.vmem [shape: f32[8,4], index: 3, kind: input, shape index: {}]
  %s4 = inlined_call_operand.vmem [shape: f32[8,1], index: 4, kind: input, shape index: {}]
  %s5 = inlined_call_operand.hbm [shape: f32[4,512], index: 5, kind: output, shape index: {0}]
  %s6 = inlined_call_operand.hbm [shape: f32[4,512], index: 6, kind: output, shape index: {1}]
  %7 = xla_tuple %s5, %s6
  %s8 = sld [smem:[#allocation0]]
  $region46: #{tpu_custom_call.1} parent=0
    _
  %s10 = ssub.s32 1, %s8
  %s11 = scalar_select 0, %s10, %s8
  $region1: #{tpu_custom_call.1} parent=0
    #allocation2 [shape = 'u8[98304]{0}', space=vmem, size = 0x18000, scoped, tag = 'input window, operand 0, single buffered']
    #allocation3 [shape = 's32[1]{0}', space=sflag, size = 0x4, scoped, tag = 'scoped memory for tpu_custom_call.1']
    #allocation4 [shape = 's32[1]{0}', space=sflag, size = 0x4, scoped, tag = 'scoped memory for tpu_custom_call.1']
    #allocation5 [shape = 'u8[4096]{0}', space=vmem, size = 0x1000, scoped, tag = 'input window, operand 2, single buffered']
    #allocation6 [shape = 's32[1]{0}', space=sflag, size = 0x4, scoped, tag = 'scoped memory for tpu_custom_call.1']
    #allocation7 [shape = 'u8[8192]{0}', space=vmem, size = 0x2000, scoped, tag = 'output window, operand 0, single buffered']
    #allocation8 [shape = 'u8[8192]{0}', space=vmem, size = 0x2000, scoped, tag = 'output window, operand 1, single buffered']
    #allocation9 [shape = 's32[1]{0}', space=sflag, size = 0x4, scoped, tag = 'scoped memory for tpu_custom_call.1']
    %12 = vsyncpa [#allocation3], 0
    %13 = vsyncpa [#allocation6], 0
    %14 = vsyncpa [#allocation4], 0
    %15 = vsyncpa [#allocation9], 0
    // Predicated region
    $region2: #{tpu_custom_call.1} parent=1 // pred_check
      _
    $region3: #{tpu_custom_call.1} parent=1 // pred_check_branch
      %17 = sbr.rel (0) target = $region5
    $region4: #{tpu_custom_call.1} parent=1 // pred_region
      %19 = vsyncadd [#allocation3], 0
      %s20 = sshll.u32 %s0, 4
      %s21 = int_to_ptr.hbm [resolvable:$true] %s20
      %s22 = sshll.u32 [#allocation2], 4
      %s23 = int_to_ptr.vmem [resolvable:$true] %s22
      %28 = dma.hbm_to_vmem [thread:$0]  %s21, 3072, %s23, [#allocation3], 512, 512, 32
    $region5: #{tpu_custom_call.1} parent=1 // pred_fallthru
      _
    // Predicated region
    $region6: #{tpu_custom_call.1} parent=1 // pred_check
      _
    $region7: #{tpu_custom_call.1} parent=1 // pred_check_branch
      %30 = sbr.rel (0) target = $region9
    $region8: #{tpu_custom_call.1} parent=1 // pred_region
      _
    $region9: #{tpu_custom_call.1} parent=1 // pred_fallthru
      _
    // Predicated region
    $region10: #{tpu_custom_call.1} parent=1 // pred_check
      _
    $region11: #{tpu_custom_call.1} parent=1 // pred_check_branch
      %32 = sbr.rel (0) target = $region13
    $region12: #{tpu_custom_call.1} parent=1 // pred_region
      %34 = vsyncadd [#allocation6], 0
      %s36 = sshll.u32 %s2, 4
      %s37 = int_to_ptr.hbm [resolvable:$true] %s36
      %s38 = sshll.u32 [#allocation5], 4
      %s39 = int_to_ptr.vmem [resolvable:$true] %s38
      %41 = dma.hbm_to_vmem [thread:$0]  %s37, 128, %s39, [#allocation6]
    $region13: #{tpu_custom_call.1} parent=1 // pred_fallthru
      _
    // Predicated region
    $region14: #{tpu_custom_call.1} parent=1 // pred_check
      _
    $region15: #{tpu_custom_call.1} parent=1 // pred_check_branch
      %43 = sbr.rel (0) target = $region17
    $region16: #{tpu_custom_call.1} parent=1 // pred_region
      _
    $region17: #{tpu_custom_call.1} parent=1 // pred_fallthru
      _
    // Predicated region
    $region18: #{tpu_custom_call.1} parent=1 // pred_check
      _
    $region19: #{tpu_custom_call.1} parent=1 // pred_check_branch
      %45 = sbr.rel (0) target = $region21
    $region20: #{tpu_custom_call.1} parent=1 // pred_region
      _
    $region21: #{tpu_custom_call.1} parent=1 // pred_fallthru
      _
    // Predicated region
    $region22: #{tpu_custom_call.1} parent=1 // pred_check
      _
    $region23: #{tpu_custom_call.1} parent=1 // pred_check_branch
      %47 = sbr.rel (0) target = $region25
    $region24: #{tpu_custom_call.1} parent=1 // pred_region
      %49 = dma.done [#allocation3], 3072
    $region25: #{tpu_custom_call.1} parent=1 // pred_fallthru
      _
    // Predicated region
    $region26: #{tpu_custom_call.1} parent=1 // pred_check
      _
    $region27: #{tpu_custom_call.1} parent=1 // pred_check_branch
      %51 = sbr.rel (0) target = $region29
    $region28: #{tpu_custom_call.1} parent=1 // pred_region
      %53 = dma.done [#allocation6], 128
    $region29: #{tpu_custom_call.1} parent=1 // pred_fallthru
      _
    %v54 = vld [vmem:[#allocation5] sm:$0xff]
    %v55 = vld [vmem:[#allocation2] sm:$0xff]
    %v56 = vld [vmem:[#allocation2 + $0x8] sm:$0xff]
    %v57 = vld [vmem:[#allocation2 + $0x10] sm:$0xff]
    %v58 = vld [vmem:[#allocation2 + $0x18] sm:$0xff]
    %v59 = vld [vmem:[#allocation2 + $0x20] sm:$0xff]
    %v60 = vld [vmem:[#allocation2 + $0x28] sm:$0xff]
    %v61 = vld [vmem:[#allocation2 + $0x30] sm:$0xff]
    %v62 = vld [vmem:[#allocation2 + $0x38] sm:$0xff]
    %v63 = vld [vmem:[#allocation2 + $0x40] sm:$0xff]
    %v64 = vld [vmem:[#allocation2 + $0x48] sm:$0xff]
    %v65 = vld [vmem:[#allocation2 + $0x50] sm:$0xff]
    %v66 = vld [vmem:[#allocation2 + $0x58] sm:$0xff]
    %v67 = vld [vmem:[#allocation2 + $0x60] sm:$0xff]
    %v68 = vld [vmem:[#allocation2 + $0x68] sm:$0xff]
    %v69 = vld [vmem:[#allocation2 + $0x70] sm:$0xff]
    %v70 = vld [vmem:[#allocation2 + $0x78] sm:$0xff]
    %v71 = vld [vmem:[#allocation2 + $0x80] sm:$0xff]
    %v72 = vld [vmem:[#allocation2 + $0x88] sm:$0xff]
    %v73 = vld [vmem:[#allocation2 + $0x90] sm:$0xff]
    %v74 = vld [vmem:[#allocation2 + $0x98] sm:$0xff]
    %v75 = vld [vmem:[#allocation2 + $0xa0] sm:$0x7]
    %v76 = vld [vmem:[#allocation2 + $0xa8] sm:$0x7]
    %v77 = vld [vmem:[#allocation2 + $0xb0] sm:$0x7]
    %v78 = vld [vmem:[#allocation2 + $0xb8] sm:$0x7]
    %vm79 = vcmask 351232
    %v81 = vsel %vm79, %v54, 0
    %vm83 = vcmask 1042432
    %v85 = vsel %vm83, %v75, 0
    %v88 = vsel %vm83, %v76, 0
    %v91 = vsel %vm83, %v77, 0
    %v94 = vsel %vm83, %v78, 0
    %96 = vmatpush.msra.mxu0 0.0
    %97 = vmatpush.msra.mxu0 0.0
    %98 = vmatpush.msra.mxu0 0.0
    %99 = vmatpush.msra.mxu0 0.0
    %100 = vmatpush.msra.mxu0 0.0
    %101 = vmatpush.msra.mxu0 0.0
    %102 = vmatpush.msra.mxu0 0.0
    %103 = vmatpush.msra.mxu0 0.0
    %104 = vmatpush.msra.mxu0 0.0
    %105 = vmatpush.msra.mxu0 0.0
    %106 = vmatpush.msra.mxu0 %v85
    %107 = vmatpush.msra.mxu0 %v71
    %108 = vmatpush.msra.mxu0 %v67
    %109 = vmatpush.msra.mxu0 %v63
    %110 = vmatpush.msra.mxu0 %v59
    %111 = vmatpush.msra.mxu0 %v55
    %112 = vmatmul.f32.gmra.mxu0 %v81
    %v113 = vpop.f32.mrf.mxu0
    %v114 = vadd.f32 0.0, %v113
    %115 = vdwg.mxu0
    %116 = vmatpush.msra.mxu0 0.0
    %117 = vmatpush.msra.mxu0 0.0
    %118 = vmatpush.msra.mxu0 0.0
    %119 = vmatpush.msra.mxu0 0.0
    %120 = vmatpush.msra.mxu0 0.0
    %121 = vmatpush.msra.mxu0 0.0
    %122 = vmatpush.msra.mxu0 0.0
    %123 = vmatpush.msra.mxu0 0.0
    %124 = vmatpush.msra.mxu0 0.0
    %125 = vmatpush.msra.mxu0 0.0
    %126 = vmatpush.msra.mxu0 %v88
    %127 = vmatpush.msra.mxu0 %v72
    %128 = vmatpush.msra.mxu0 %v68
    %129 = vmatpush.msra.mxu0 %v64
    %130 = vmatpush.msra.mxu0 %v60
    %131 = vmatpush.msra.mxu0 %v56
    %132 = vmatmul.f32.gmra.mxu0 %v81
    %v133 = vpop.f32.mrf.mxu0
    %v134 = vadd.f32 0.0, %v133
    %135 = vdwg.mxu0
    %136 = vmatpush.msra.mxu0 0.0
    %137 = vmatpush.msra.mxu0 0.0
    %138 = vmatpush.msra.mxu0 0.0
    %139 = vmatpush.msra.mxu0 0.0
    %140 = vmatpush.msra.mxu0 0.0
    %141 = vmatpush.msra.mxu0 0.0
    %142 = vmatpush.msra.mxu0 0.0
    %143 = vmatpush.msra.mxu0 0.0
    %144 = vmatpush.msra.mxu0 0.0
    %145 = vmatpush.msra.mxu0 0.0
    %146 = vmatpush.msra.mxu0 %v91
    %147 = vmatpush.msra.mxu0 %v73
    %148 = vmatpush.msra.mxu0 %v69
    %149 = vmatpush.msra.mxu0 %v65
    %150 = vmatpush.msra.mxu0 %v61
    %151 = vmatpush.msra.mxu0 %v57
    %152 = vmatmul.f32.gmra.mxu0 %v81
    %v153 = vpop.f32.mrf.mxu0
    %v154 = vadd.f32 0.0, %v153
    %155 = vdwg.mxu0
    %156 = vmatpush.msra.mxu0 0.0
    %157 = vmatpush.msra.mxu0 0.0
    %158 = vmatpush.msra.mxu0 0.0
    %159 = vmatpush.msra.mxu0 0.0
    %160 = vmatpush.msra.mxu0 0.0
    %161 = vmatpush.msra.mxu0 0.0
    %162 = vmatpush.msra.mxu0 0.0
    %163 = vmatpush.msra.mxu0 0.0
    %164 = vmatpush.msra.mxu0 0.0
    %165 = vmatpush.msra.mxu0 0.0
    %166 = vmatpush.msra.mxu0 %v94
    %167 = vmatpush.msra.mxu0 %v74
    %168 = vmatpush.msra.mxu0 %v70
    %169 = vmatpush.msra.mxu0 %v66
    %170 = vmatpush.msra.mxu0 %v62
    %171 = vmatpush.msra.mxu0 %v58
    %172 = vmatmul.f32.gmra.mxu0 %v81
    %v173 = vpop.f32.mrf.mxu0
    %v174 = vadd.f32 0.0, %v173
    %175 = vdwg.mxu0
    %v176 = vtanh.pop %v114
    %v177 = vtanh.pop %v134
    %v178 = vtanh.pop %v154
    %v179 = vtanh.pop %v174
    %v180 = vxor.u32 %v114, 2147483648
    %v181 = vxor.u32 %v134, 2147483648
    %v182 = vxor.u32 %v154, 2147483648
    %v183 = vxor.u32 %v174, 2147483648
    %v184 = vmul.f32 %v180, 1.442695
    %v185 = vpow.pop %v184
    %v186 = vmul.f32 %v181, 1.442695
    %v187 = vpow.pop %v186
    %v188 = vmul.f32 %v182, 1.442695
    %v189 = vpow.pop %v188
    %v190 = vmul.f32 %v183, 1.442695
    %v191 = vpow.pop %v190
    %v192 = vadd.f32 %v185, 1.0
    %v193 = vadd.f32 %v187, 1.0
    %v194 = vadd.f32 %v189, 1.0
    %v195 = vadd.f32 %v191, 1.0
    %v196 = vrcp.pop %v192
    %v197 = vmul.f32 %v192, %v196
    %v198 = vsub.f32 1.0, %v197
    %v199 = vmul.f32 %v196, %v198
    %v200 = vadd.f32 %v196, %v199
    %vm201 = vweird.f32 %v192
    %vm202 = vweird.f32 %v196
    %vm203 = vmor %vm201, %vm202
    %v204 = vsel %vm203, %v196, %v200
    %v205 = vand.u32 2147483647, %v192
    %vm206 = vcmp.eq.f32.partialorder %v205, 8.507059e+37
    %v207 = vand.u32 %v192, 2147483648
    %v208 = vor.u32 1.1754944e-38, %v207
    %v209 = vsel %vm206, %v208, %v204
    %v210 = vmul.f32 1.0, %v209
    %v211 = vrcp.pop %v193
    %v212 = vmul.f32 %v193, %v211
    %v213 = vsub.f32 1.0, %v212
    %v214 = vmul.f32 %v211, %v213
    %v215 = vadd.f32 %v211, %v214
    %vm216 = vweird.f32 %v193
    %vm217 = vweird.f32 %v211
    %vm218 = vmor %vm216, %vm217
    %v219 = vsel %vm218, %v211, %v215
    %v220 = vand.u32 2147483647, %v193
    %vm221 = vcmp.eq.f32.partialorder %v220, 8.507059e+37
    %v222 = vand.u32 %v193, 2147483648
    %v223 = vor.u32 1.1754944e-38, %v222
    %v224 = vsel %vm221, %v223, %v219
    %v225 = vmul.f32 1.0, %v224
    %v226 = vrcp.pop %v194
    %v227 = vmul.f32 %v194, %v226
    %v228 = vsub.f32 1.0, %v227
    %v229 = vmul.f32 %v226, %v228
    %v230 = vadd.f32 %v226, %v229
    %vm231 = vweird.f32 %v194
    %vm232 = vweird.f32 %v226
    %vm233 = vmor %vm231, %vm232
    %v234 = vsel %vm233, %v226, %v230
    %v235 = vand.u32 2147483647, %v194
    %vm236 = vcmp.eq.f32.partialorder %v235, 8.507059e+37
    %v237 = vand.u32 %v194, 2147483648
    %v238 = vor.u32 1.1754944e-38, %v237
    %v239 = vsel %vm236, %v238, %v234
    %v240 = vmul.f32 1.0, %v239
    %v241 = vrcp.pop %v195
    %v242 = vmul.f32 %v195, %v241
    %v243 = vsub.f32 1.0, %v242
    %v244 = vmul.f32 %v241, %v243
    %v245 = vadd.f32 %v241, %v244
    %vm246 = vweird.f32 %v195
    %vm247 = vweird.f32 %v241
    %vm248 = vmor %vm246, %vm247
    %v249 = vsel %vm248, %v241, %v245
    %v250 = vand.u32 2147483647, %v195
    %vm251 = vcmp.eq.f32.partialorder %v250, 8.507059e+37
    %v252 = vand.u32 %v195, 2147483648
    %v253 = vor.u32 1.1754944e-38, %v252
    %v254 = vsel %vm251, %v253, %v249
    %v255 = vmul.f32 1.0, %v254
    %v260 = vrot.slane %v210, 4
    %v261 = vrot.slane %v225, 4
    %v262 = vrot.slane %v240, 4
    %v263 = vrot.slane %v255, 4
    %v268 = vmul.f32 %v176, %v260
    %v269 = vmul.f32 %v177, %v261
    %v270 = vmul.f32 %v178, %v262
    %v271 = vmul.f32 %v179, %v263
    %v272 = vld [vmem:[%s3] sm:$0xff]
    %v273 = vld [vmem:[%s4] sm:$0xff]
    %275 = vset.pattern.permute.xlu0 0
    %276 = vperm.xlu0 %275, %v273
    %v277 = vpop.permute.xlu0 %276
    %vm279 = vcmask 31744
    %v281 = vsel %vm279, %v272, 0
    %vm283 = vcmask 1043456
    %v285 = vsel %vm283, %v268, 0
    %v288 = vsel %vm283, %v269, 0
    %v291 = vsel %vm283, %v270, 0
    %v294 = vsel %vm283, %v271, 0
    %296 = vmatpush.msra.mxu0 0.0
    %297 = vmatpush.msra.mxu0 0.0
    %298 = vmatpush.msra.mxu0 0.0
    %299 = vmatpush.msra.mxu0 0.0
    %300 = vmatpush.msra.mxu0 0.0
    %301 = vmatpush.msra.mxu0 0.0
    %302 = vmatpush.msra.mxu0 0.0
    %303 = vmatpush.msra.mxu0 0.0
    %304 = vmatpush.msra.mxu0 0.0
    %305 = vmatpush.msra.mxu0 0.0
    %306 = vmatpush.msra.mxu0 0.0
    %307 = vmatpush.msra.mxu0 0.0
    %308 = vmatpush.msra.mxu0 0.0
    %309 = vmatpush.msra.mxu0 0.0
    %310 = vmatpush.msra.mxu0 0.0
    %311 = vmatpush.msra.mxu0 %v285
    %312 = vmatmul.f32.gmra.mxu0 %v281
    %v313 = vpop.f32.mrf.mxu0
    %v314 = vadd.f32 %v277, %v313
    %315 = vdwg.mxu0
    %316 = vmatpush.msra.mxu0 0.0
    %317 = vmatpush.msra.mxu0 0.0
    %318 = vmatpush.msra.mxu0 0.0
    %319 = vmatpush.msra.mxu0 0.0
    %320 = vmatpush.msra.mxu0 0.0
    %321 = vmatpush.msra.mxu0 0.0
    %322 = vmatpush.msra.mxu0 0.0
    %323 = vmatpush.msra.mxu0 0.0
    %324 = vmatpush.msra.mxu0 0.0
    %325 = vmatpush.msra.mxu0 0.0
    %326 = vmatpush.msra.mxu0 0.0
    %327 = vmatpush.msra.mxu0 0.0
    %328 = vmatpush.msra.mxu0 0.0
    %329 = vmatpush.msra.mxu0 0.0
    %330 = vmatpush.msra.mxu0 0.0
    %331 = vmatpush.msra.mxu0 %v288
    %332 = vmatmul.f32.gmra.mxu0 %v281
    %v333 = vpop.f32.mrf.mxu0
    %v334 = vadd.f32 %v277, %v333
    %335 = vdwg.mxu0
    %336 = vmatpush.msra.mxu0 0.0
    %337 = vmatpush.msra.mxu0 0.0
    %338 = vmatpush.msra.mxu0 0.0
    %339 = vmatpush.msra.mxu0 0.0
    %340 = vmatpush.msra.mxu0 0.0
    %341 = vmatpush.msra.mxu0 0.0
    %342 = vmatpush.msra.mxu0 0.0
    %343 = vmatpush.msra.mxu0 0.0
    %344 = vmatpush.msra.mxu0 0.0
    %345 = vmatpush.msra.mxu0 0.0
    %346 = vmatpush.msra.mxu0 0.0
    %347 = vmatpush.msra.mxu0 0.0
    %348 = vmatpush.msra.mxu0 0.0
    %349 = vmatpush.msra.mxu0 0.0
    %350 = vmatpush.msra.mxu0 0.0
    %351 = vmatpush.msra.mxu0 %v291
    %352 = vmatmul.f32.gmra.mxu0 %v281
    %v353 = vpop.f32.mrf.mxu0
    %v354 = vadd.f32 %v277, %v353
    %355 = vdwg.mxu0
    %356 = vmatpush.msra.mxu0 0.0
    %357 = vmatpush.msra.mxu0 0.0
    %358 = vmatpush.msra.mxu0 0.0
    %359 = vmatpush.msra.mxu0 0.0
    %360 = vmatpush.msra.mxu0 0.0
    %361 = vmatpush.msra.mxu0 0.0
    %362 = vmatpush.msra.mxu0 0.0
    %363 = vmatpush.msra.mxu0 0.0
    %364 = vmatpush.msra.mxu0 0.0
    %365 = vmatpush.msra.mxu0 0.0
    %366 = vmatpush.msra.mxu0 0.0
    %367 = vmatpush.msra.mxu0 0.0
    %368 = vmatpush.msra.mxu0 0.0
    %369 = vmatpush.msra.mxu0 0.0
    %370 = vmatpush.msra.mxu0 0.0
    %371 = vmatpush.msra.mxu0 %v294
    %372 = vmatmul.f32.gmra.mxu0 %v281
    %v373 = vpop.f32.mrf.mxu0
    %v374 = vadd.f32 %v277, %v373
    %375 = vdwg.mxu0
    %v376 = vld [vmem:[%s1] sm:$0xff]
    %v377 = vld [vmem:[%s1 + $0x8] sm:$0xff]
    %v382 = vrot.slane %v334, 4
    %v383 = vrot.slane %v374, 4
    %v384 = vsel %vm283, %v314, %v382
    %v385 = vsel %vm283, %v354, %v383
    %v388 = vadd.f32 %v376, %v384
    %v389 = vadd.f32 %v377, %v385
    %390 = vst [vmem:[#allocation7] sm:$0xff] %v388
    %391 = vst [vmem:[#allocation7 + $0x8] sm:$0xff] %v389
    %392 = vst.sshfl [vmem:[#allocation1] sm:$0xff pattern:$0x75316420] %v314
    %393 = vst.sshfl [vmem:[#allocation1 + $0x8] sm:$0xff pattern:$0x75316420] %v334
    %394 = vst.sshfl [vmem:[#allocation1 + $0x10] sm:$0xff pattern:$0x75316420] %v354
    %395 = vst.sshfl [vmem:[#allocation1 + $0x18] sm:$0xff pattern:$0x75316420] %v374
    %s396 = scalar_lea.vmem [#allocation1], 1
    %v397 = vld [vmem:[%s396] ss:$2 sm:$0xff]
    %s398 = scalar_lea.vmem [#allocation1], 17
    %v399 = vld [vmem:[%s398] ss:$2 sm:$0xff]
    %402 = vst [vmem:[#allocation8] sm:$0xff] %v397
    %403 = vst [vmem:[#allocation8 + $0x8] sm:$0xff] %v399
    // Predicated region
    $region30: #{tpu_custom_call.1} parent=1 // pred_check
      _
    $region31: #{tpu_custom_call.1} parent=1 // pred_check_branch
      %405 = sbr.rel (0) target = $region33
    $region32: #{tpu_custom_call.1} parent=1 // pred_region
      %407 = vsyncadd [#allocation4], 0
      %s409 = sshll.u32 [#allocation7], 4
      %s410 = int_to_ptr.vmem [resolvable:$true] %s409
      %s411 = sshll.u32 %s5, 4
      %s412 = int_to_ptr.hbm [resolvable:$true] %s411
      %414 = dma.vmem_to_hbm [thread:$0]  %s410, 256, %s412, [#allocation4]
    $region33: #{tpu_custom_call.1} parent=1 // pred_fallthru
      _
    // Predicated region
    $region34: #{tpu_custom_call.1} parent=1 // pred_check
      _
    $region35: #{tpu_custom_call.1} parent=1 // pred_check_branch
      %416 = sbr.rel (0) target = $region37
    $region36: #{tpu_custom_call.1} parent=1 // pred_region
      %418 = vsyncadd [#allocation9], 0
      %s420 = sshll.u32 [#allocation8], 4
      %s421 = int_to_ptr.vmem [resolvable:$true] %s420
      %s422 = sshll.u32 %s6, 4
      %s423 = int_to_ptr.hbm [resolvable:$true] %s422
      %425 = dma.vmem_to_hbm [thread:$0]  %s421, 256, %s423, [#allocation9]
    $region37: #{tpu_custom_call.1} parent=1 // pred_fallthru
      _
    // Predicated region
    $region38: #{tpu_custom_call.1} parent=1 // pred_check
      _
    $region39: #{tpu_custom_call.1} parent=1 // pred_check_branch
      %427 = sbr.rel (0) target = $region41
    $region40: #{tpu_custom_call.1} parent=1 // pred_region
      %429 = dma.done [#allocation4], 256
    $region41: #{tpu_custom_call.1} parent=1 // pred_fallthru
      _
    // Predicated region
    $region42: #{tpu_custom_call.1} parent=1 // pred_check
      _
    $region43: #{tpu_custom_call.1} parent=1 // pred_check_branch
      %431 = sbr.rel (0) target = $region45
    $region44: #{tpu_custom_call.1} parent=1 // pred_region
      %433 = dma.done [#allocation9], 256
    $region45: #{tpu_custom_call.1} parent=1 // pred_fallthru
      _
    %434 = vsyncpa [#allocation3], 1
    %435 = vsyncpa [#allocation6], 1
    %436 = vsyncpa [#allocation4], 1
    %437 = vsyncpa [#allocation9], 1

</llo_original>
